<compile_context>
chip_gen: v7x
topology: tpu7x:2x2x1
jax: 0.10.0
libtpu: 0.0.40
codegen_flags: <defaults>
</compile_context>

<pallas_src>
import functools

import jax
import jax.numpy as jnp
from jax.experimental import pallas as pl
from jax.experimental.pallas import tpu as pltpu

# "config" of the module, fixed deterministically in-script.
LOSS_WEIGHTS = {"alpha": 1.0, "beta": 0.5, "gamma": 0.25}
MR_BIAS = 0.1


def _pick_pair_tile(bp):
    """Row-tile for the pairwise block: keep the (tm, bp) f32 intermediates ~<= 4 MiB."""
    if bp <= 512:
        return bp
    budget = max(128, (1024 * 1024) // bp)          # tm * bp <= 1M f32 elements
    for cand in (512, 256, 128):
        if cand <= budget and bp % cand == 0:
            return cand
    return 128


def _loss_kernel(b_ref, pg_ref, out_ref, acc_ref, *, tm, alpha, beta, gamma, mr_bias):
    i = pl.program_id(0)
    b = b_ref[0]                                     # true batch size (SMEM scalar)
    inv_b = 1.0 / b.astype(jnp.float32)

    p = pg_ref[0:1, :].astype(jnp.float32)           # (1, BP) predictions (zero-padded tail)
    bp = p.shape[1]

    # Lane-validity row for the padded tail (tiny (1, BP) iota, dynamic in b).
    vrow = (jax.lax.broadcasted_iota(jnp.int32, (1, bp), 1) < b).astype(jnp.float32)

    # --- MSE + SIM: computed once from the resident (1, BP) rows -----------------------
    @pl.when(i == 0)
    def _():
        g = pg_ref[1:2, :].astype(jnp.float32)        # (1, BP) correct_output
        d = p - g                                     # padded lanes are 0 - 0
        mse = jnp.sum(d * d, keepdims=True) * inv_b   # mean over the true batch
        dot = jnp.sum(p * g, keepdims=True)
        pp = jnp.sum(p * p, keepdims=True)
        gg = jnp.sum(g * g, keepdims=True)
        denom = jnp.maximum(jnp.sqrt(pp) * jnp.sqrt(gg), 1e-8)   # torch cosine_similarity eps
        sim = 1.0 - dot / denom                       # (1, 1)
        acc_ref[...] = alpha * mse + gamma * sim

    # --- MarginRankingLoss tile: rows m in [i*tm, i*tm + tm), all columns n ------------
    off = pl.multiple_of(i * tm, tm)
    p_tile = pg_ref[0:1, pl.ds(off, tm)].astype(jnp.float32)               # (1, tm)
    # Column copy of this tile's predictions via a small square transpose (tm <= 512).
    p_col = jnp.transpose(jnp.broadcast_to(p_tile, (tm, tm)))[:, 0:1]      # (tm, 1)
    pd = p_col - p                                                         # (tm, BP): p[m] - p[n]
    # n-mask folded into the bias row: padded columns give max(0, 0 - |pd|) == 0,
    # so no extra (tm, BP) mask pass is needed.
    terms = jnp.maximum(0.0, mr_bias * vrow - jnp.abs(pd))                 # (tm, BP)
    row_sum = jnp.sum(terms, axis=1, keepdims=True)                        # (tm, 1) lane reduce
    m_valid = ((jax.lax.broadcasted_iota(jnp.int32, (tm, 1), 0) + off) < b).astype(jnp.float32)
    tile_mr = jnp.sum(row_sum * m_valid, keepdims=True)                    # (1, 1)
    acc_ref[...] += (beta * inv_b * inv_b) * tile_mr

    @pl.when(i == pl.num_programs(0) - 1)
    def _():
        out_ref[...] = acc_ref[...]


def document_bert_scoring_loss(predictions, correct_output,
                               *, alpha=LOSS_WEIGHTS["alpha"],
                               beta=LOSS_WEIGHTS["beta"],
                               gamma=LOSS_WEIGHTS["gamma"],
                               mr_bias=MR_BIAS):
    assert predictions.shape == correct_output.shape and predictions.ndim == 1
    b = int(predictions.shape[0])
    bp = max(128, ((b + 127) // 128) * 128)           # lane-dense width, bucketed to 128

    # Keep bf16 inputs as bf16 (half the DMA bytes); cast happens once in-kernel.
    if predictions.dtype not in (jnp.float32, jnp.bfloat16):
        predictions = predictions.astype(jnp.float32)
    correct_output = correct_output.astype(predictions.dtype)

    pg = jnp.stack([predictions, correct_output])     # (2, b): one packed input, one DMA
    if bp != b:
        pg = jnp.pad(pg, ((0, 0), (0, bp - b)))        # single pad op, zero tail

    tm = _pick_pair_tile(bp)
    n_tiles = bp // tm

    kernel = functools.partial(_loss_kernel, tm=tm, alpha=float(alpha), beta=float(beta),
                               gamma=float(gamma), mr_bias=float(mr_bias))

    grid_spec = pltpu.PrefetchScalarGridSpec(
        num_scalar_prefetch=1,                         # b lands in SMEM
        grid=(n_tiles,),
        in_specs=[pl.BlockSpec((2, bp), lambda i, b_sm: (0, 0))],   # resident full block
        out_specs=pl.BlockSpec((1, 1), lambda i, b_sm: (0, 0)),
        scratch_shapes=[pltpu.VMEM((1, 1), jnp.float32)],
    )
    out = pl.pallas_call(
        kernel,
        out_shape=jax.ShapeDtypeStruct((1, 1), jnp.float32),
        grid_spec=grid_spec,
        compiler_params=pltpu.CompilerParams(dimension_semantics=("arbitrary",)),
    )(jnp.asarray([b], dtype=jnp.int32), pg)
    # PyTorch module returns a (1,)-shaped tensor (scalar MSE/MR + (1,)-shaped SIM term).
    return out.reshape(1)


def _reference(p, g, alpha, beta, gamma, mr_bias):
    """Pure-JAX reference mirroring the PyTorch module semantics (nested-where form)."""
    b = p.shape[0]
    mse = jnp.mean((p - g) ** 2)
    pd = p[:, None] - p[None, :]
    gd = g[:, None] - g[None, :]
    r = jnp.where(pd > 0.0, 1.0, jnp.where(pd < 0.0, -1.0, -jnp.sign(gd)))
    mr = jnp.sum(jnp.maximum(0.0, mr_bias - r * pd)) / (b * b)
    cos = jnp.dot(p, g) / jnp.maximum(jnp.linalg.norm(p) * jnp.linalg.norm(g), 1e-8)
    sim = 1.0 - cos
    return (alpha * mse + beta * mr + gamma * sim).reshape(1)


if __name__ == "__main__":
    key = jax.random.PRNGKey(0)
    k1, k2 = jax.random.split(key)
    batch = 8
    # score-like values in a small range (diagonal ties exercise the tie branch)
    predictions = jax.random.uniform(k1, (batch,), jnp.float32, minval=0.0, maxval=10.0)
    correct_output = jax.random.uniform(k2, (batch,), jnp.float32, minval=0.0, maxval=10.0)

    loss = document_bert_scoring_loss(predictions, correct_output)
    loss = jax.block_until_ready(loss)

    ref = _reference(predictions, correct_output,
                     LOSS_WEIGHTS["alpha"], LOSS_WEIGHTS["beta"],
                     LOSS_WEIGHTS["gamma"], MR_BIAS)
    assert loss.shape == (1,)
    assert jnp.allclose(loss, ref, atol=1e-4, rtol=1e-4), (loss, ref)

    print("KERNEL_OK")
</pallas_src>

<mosaic_0001>
module attributes {stable_mosaic.version = 11 : i64} {
  func.func @_loss_kernel(%arg0: i32, %arg1: memref<1xi32, #tpu.memory_space<smem>>, %arg2: memref<2x128xf32, #tpu.memory_space<vmem>>, %arg3: memref<1x1xf32, #tpu.memory_space<vmem>>, %arg4: memref<1x1xf32, #tpu.memory_space<vmem>>) attributes {dimension_semantics = [#tpu.dimension_semantics<arbitrary>], iteration_bounds = array<i64: 1>, scalar_prefetch = 1 : i64, scratch_operands = 1 : i64, tpu.core_type = #tpu.core_type<tc>, window_params = [{pipeline_mode = #tpu.pipeline_mode<synchronous>, transform_indices = @transform_0, window_bounds = array<i64: 2, 128>}, {pipeline_mode = #tpu.pipeline_mode<synchronous>, transform_indices = @transform_1, window_bounds = array<i64: 1, 1>}]} {
    %c0 = arith.constant 0 : index
    %0 = memref.load %arg1[%c0] : memref<1xi32, #tpu.memory_space<smem>>
    %1 = arith.sitofp %0 : i32 to f32
    %cst = arith.constant 1.000000e+00 : f32
    %2 = arith.divf %cst, %1 : f32
    %c0_0 = arith.constant 0 : index
    %c0_1 = arith.constant 0 : index
    %3 = vector.load %arg2[%c0_0, %c0_1] : memref<2x128xf32, #tpu.memory_space<vmem>>, vector<1x128xf32>
    %4 = tpu.iota {dimensions = array<i32: 1>} : vector<1x128xi32>
    %5 = vector.broadcast %0 : i32 to vector<1x128xi32>
    %6 = arith.cmpi slt, %4, %5 : vector<1x128xi32>
    %7 = arith.extui %6 : vector<1x128xi1> to vector<1x128xi32>
    %8 = arith.sitofp %7 : vector<1x128xi32> to vector<1x128xf32>
    %c0_i32 = arith.constant 0 : i32
    %9 = arith.cmpi eq, %arg0, %c0_i32 : i32
    %10 = arith.extui %9 : i1 to i32
    %c0_i32_2 = arith.constant 0 : i32
    %11 = arith.cmpi ne, %10, %c0_i32_2 : i32
    scf.if %11 {
      %c1 = arith.constant 1 : index
      %c0_15 = arith.constant 0 : index
      %55 = vector.load %arg2[%c1, %c0_15] : memref<2x128xf32, #tpu.memory_space<vmem>>, vector<1x128xf32>
      %56 = arith.subf %3, %55 : vector<1x128xf32>
      %57 = arith.mulf %56, %56 : vector<1x128xf32>
      %58 = vector.shape_cast %57 : vector<1x128xf32> to vector<1x1x128xf32>
      %cst_16 = arith.constant dense<0.000000e+00> : vector<1xf32>
      %59 = vector.multi_reduction <add>, %58, %cst_16 [1, 2] : vector<1x1x128xf32> to vector<1xf32>
      %60 = vector.shape_cast %59 : vector<1xf32> to vector<1x1x1xf32>
      %61 = vector.extract %60[0, 0, 0] : f32 from vector<1x1x1xf32>
      %62 = vector.broadcast %61 : f32 to vector<1x1xf32>
      %63 = vector.broadcast %2 : f32 to vector<1x1xf32>
      %64 = arith.mulf %62, %63 : vector<1x1xf32>
      %65 = arith.mulf %3, %55 : vector<1x128xf32>
      %66 = vector.shape_cast %65 : vector<1x128xf32> to vector<1x1x128xf32>
      %cst_17 = arith.constant dense<0.000000e+00> : vector<1xf32>
      %67 = vector.multi_reduction <add>, %66, %cst_17 [1, 2] : vector<1x1x128xf32> to vector<1xf32>
      %68 = vector.shape_cast %67 : vector<1xf32> to vector<1x1x1xf32>
      %69 = vector.extract %68[0, 0, 0] : f32 from vector<1x1x1xf32>
      %70 = vector.broadcast %69 : f32 to vector<1x1xf32>
      %71 = arith.mulf %3, %3 : vector<1x128xf32>
      %72 = vector.shape_cast %71 : vector<1x128xf32> to vector<1x1x128xf32>
      %cst_18 = arith.constant dense<0.000000e+00> : vector<1xf32>
      %73 = vector.multi_reduction <add>, %72, %cst_18 [1, 2] : vector<1x1x128xf32> to vector<1xf32>
      %74 = vector.shape_cast %73 : vector<1xf32> to vector<1x1x1xf32>
      %75 = vector.extract %74[0, 0, 0] : f32 from vector<1x1x1xf32>
      %76 = vector.broadcast %75 : f32 to vector<1x1xf32>
      %77 = arith.mulf %55, %55 : vector<1x128xf32>
      %78 = vector.shape_cast %77 : vector<1x128xf32> to vector<1x1x128xf32>
      %cst_19 = arith.constant dense<0.000000e+00> : vector<1xf32>
      %79 = vector.multi_reduction <add>, %78, %cst_19 [1, 2] : vector<1x1x128xf32> to vector<1xf32>
      %80 = vector.shape_cast %79 : vector<1xf32> to vector<1x1x1xf32>
      %81 = vector.extract %80[0, 0, 0] : f32 from vector<1x1x1xf32>
      %82 = vector.broadcast %81 : f32 to vector<1x1xf32>
      %83 = math.sqrt %76 : vector<1x1xf32>
      %84 = math.sqrt %82 : vector<1x1xf32>
      %85 = arith.mulf %83, %84 : vector<1x1xf32>
      %cst_20 = arith.constant 9.99999993E-9 : f32
      %86 = vector.broadcast %cst_20 : f32 to vector<1x1xf32>
      %87 = arith.maximumf %85, %86 : vector<1x1xf32>
      %88 = arith.divf %70, %87 : vector<1x1xf32>
      %cst_21 = arith.constant 1.000000e+00 : f32
      %89 = vector.broadcast %cst_21 : f32 to vector<1x1xf32>
      %90 = arith.subf %89, %88 : vector<1x1xf32>
      %cst_22 = arith.constant 1.000000e+00 : f32
      %91 = vector.broadcast %cst_22 : f32 to vector<1x1xf32>
      %92 = arith.mulf %91, %64 : vector<1x1xf32>
      %cst_23 = arith.constant 2.500000e-01 : f32
      %93 = vector.broadcast %cst_23 : f32 to vector<1x1xf32>
      %94 = arith.mulf %93, %90 : vector<1x1xf32>
      %95 = arith.addf %92, %94 : vector<1x1xf32>
      %c0_24 = arith.constant 0 : index
      %c0_25 = arith.constant 0 : index
      %96 = vector.load %arg4[%c0_24, %c0_25] : memref<1x1xf32, #tpu.memory_space<vmem>>, vector<1x1xf32>
      tpu.vector_store %arg4[%c0_24, %c0_25], %95 {strides = array<i32>} : memref<1x1xf32, #tpu.memory_space<vmem>>, vector<1x1xf32>,
    } else {
    }
    %c128_i32 = arith.constant 128 : i32
    %12 = arith.muli %arg0, %c128_i32 : i32
    %13 = tpu.assume_multiple %12, 128 : i32
    %c0_3 = arith.constant 0 : index
    %14 = arith.index_cast %13 : i32 to index
    %15 = vector.load %arg2[%c0_3, %14] : memref<2x128xf32, #tpu.memory_space<vmem>>, vector<1x128xf32>
    %16 = vector.shape_cast %15 : vector<1x128xf32> to vector<1x128xf32>
    %17 = vector.broadcast %16 : vector<1x128xf32> to vector<128x128xf32>
    %18 = tpu.transpose %17, [1, 0] : vector<128x128xf32> -> vector<128x128xf32>
    %19 = vector.extract_strided_slice %18 {offsets = [0, 0], sizes = [128, 1], strides = [1, 1]} : vector<128x128xf32> to vector<128x1xf32>
    %20 = vector.broadcast %19 : vector<128x1xf32> to vector<128x128xf32>
    %21 = vector.broadcast %3 : vector<1x128xf32> to vector<128x128xf32>
    %22 = arith.subf %20, %21 : vector<128x128xf32>
    %cst_4 = arith.constant 1.000000e-01 : f32
    %23 = vector.broadcast %cst_4 : f32 to vector<1x128xf32>
    %24 = arith.mulf %23, %8 : vector<1x128xf32>
    %25 = math.absf %22 : vector<128x128xf32>
    %26 = vector.broadcast %24 : vector<1x128xf32> to vector<128x128xf32>
    %27 = arith.subf %26, %25 : vector<128x128xf32>
    %cst_5 = arith.constant 0.000000e+00 : f32
    %28 = vector.broadcast %cst_5 : f32 to vector<128x128xf32>
    %29 = arith.maximumf %28, %27 : vector<128x128xf32>
    %cst_6 = arith.constant dense<0.000000e+00> : vector<128xf32>
    %30 = vector.multi_reduction <add>, %29, %cst_6 [1] : vector<128x128xf32> to vector<128xf32>
    %31 = vector.shape_cast %30 : vector<128xf32> to vector<128x1xf32>
    %32 = tpu.iota {dimensions = array<i32: 0>} : vector<128x1xi32>
    %33 = vector.broadcast %13 : i32 to vector<128x1xi32>
    %34 = arith.addi %32, %33 : vector<128x1xi32>
    %35 = vector.broadcast %0 : i32 to vector<128x1xi32>
    %36 = arith.cmpi slt, %34, %35 : vector<128x1xi32>
    %37 = arith.extui %36 : vector<128x1xi1> to vector<128x1xi32>
    %38 = arith.sitofp %37 : vector<128x1xi32> to vector<128x1xf32>
    %39 = arith.mulf %31, %38 : vector<128x1xf32>
    %40 = vector.shape_cast %39 : vector<128x1xf32> to vector<1x128x1xf32>
    %cst_7 = arith.constant dense<0.000000e+00> : vector<1xf32>
    %41 = vector.multi_reduction <add>, %40, %cst_7 [1, 2] : vector<1x128x1xf32> to vector<1xf32>
    %42 = vector.shape_cast %41 : vector<1xf32> to vector<1x1x1xf32>
    %43 = vector.extract %42[0, 0, 0] : f32 from vector<1x1x1xf32>
    %44 = vector.broadcast %43 : f32 to vector<1x1xf32>
    %c0_8 = arith.constant 0 : index
    %c0_9 = arith.constant 0 : index
    %45 = vector.load %arg4[%c0_8, %c0_9] : memref<1x1xf32, #tpu.memory_space<vmem>>, vector<1x1xf32>
    %cst_10 = arith.constant 5.000000e-01 : f32
    %46 = arith.mulf %cst_10, %2 : f32
    %47 = arith.mulf %46, %2 : f32
    %48 = vector.broadcast %47 : f32 to vector<1x1xf32>
    %49 = arith.mulf %48, %44 : vector<1x1xf32>
    %50 = arith.addf %45, %49 : vector<1x1xf32>
    %c0_11 = arith.constant 0 : index
    %c0_12 = arith.constant 0 : index
    %51 = vector.load %arg4[%c0_11, %c0_12] : memref<1x1xf32, #tpu.memory_space<vmem>>, vector<1x1xf32>
    tpu.vector_store %arg4[%c0_11, %c0_12], %50 {strides = array<i32>} : memref<1x1xf32, #tpu.memory_space<vmem>>, vector<1x1xf32>,
    %c0_i32_13 = arith.constant 0 : i32
    %52 = arith.cmpi eq, %arg0, %c0_i32_13 : i32
    %53 = arith.extui %52 : i1 to i32
    %c0_i32_14 = arith.constant 0 : i32
    %54 = arith.cmpi ne, %53, %c0_i32_14 : i32
    scf.if %54 {
      %c0_15 = arith.constant 0 : index
      %c0_16 = arith.constant 0 : index
      %55 = vector.load %arg4[%c0_15, %c0_16] : memref<1x1xf32, #tpu.memory_space<vmem>>, vector<1x1xf32>
      %c0_17 = arith.constant 0 : index
      %c0_18 = arith.constant 0 : index
      %56 = vector.load %arg3[%c0_17, %c0_18] : memref<1x1xf32, #tpu.memory_space<vmem>>, vector<1x1xf32>
      tpu.vector_store %arg3[%c0_17, %c0_18], %55 {strides = array<i32>} : memref<1x1xf32, #tpu.memory_space<vmem>>, vector<1x1xf32>,
    } else {
    }
    return
  }
  func.func @transform_0(%arg0: i32, %arg1: memref<1xi32, #tpu.memory_space<smem>>) -> (i32, i32) {
    %c0_i32 = arith.constant 0 : i32
    %c0_i32_0 = arith.constant 0 : i32
    %c0_i32_1 = arith.constant 0 : i32
    return %c0_i32, %c0_i32_0 : i32, i32
  }
  func.func @transform_1(%arg0: i32, %arg1: memref<1xi32, #tpu.memory_space<smem>>) -> (i32, i32) {
    %c0_i32 = arith.constant 0 : i32
    %c0_i32_0 = arith.constant 0 : i32
    %c0_i32_1 = arith.constant 0 : i32
    return %c0_i32, %c0_i32_0 : i32, i32
  }
}

</mosaic_0001>

<llo_original>
// kernel: tpu_custom_call.1
$region0: #{tpu_custom_call.1}
  #allocation0 [shape = 'u32[]', space=smem, size = 0x4, offset = 0x4, fixed_abs, tag = 'smem constant byte address 0x4 - core index']
  #allocation1 [shape = 'u32[144,128]{1,0:T(1,128)}', space=vmem, size = 0x12000, scoped, tag = 'internal scratch']
  #allocation2 [shape = 'f32[1,1]{1,0:T(1,128)}', space=vmem, size = 0x200, scoped, tag = 'scratch operand']
  #allocation3 [shape = 's32[1]{0}', space=sflag, size = 0x4, scoped, tag = 'scoped memory for tpu_custom_call.1']
  #allocation4 [shape = 's32[1]{0:T(128)S(6)}', space=smem, size = 0x200, scoped, tag = 'prefetched SMEM operand 0']
  %s0 = inlined_call_operand.<no memory space> [shape: s32[1], index: 0, kind: input, shape index: {}]
  %s1 = inlined_call_operand.vmem [shape: f32[2,128], index: 1, kind: input, shape index: {}]
  %s2 = inlined_call_operand.hbm [shape: f32[1,1], index: 2, kind: output, shape index: {}]
  %s3 = sld [smem:[#allocation0]]
  $region22: #{tpu_custom_call.1} parent=0
    _
  %s5 = ssub.s32 1, %s3
  %s6 = scalar_select 0, %s5, %s3
  %7 = sst [smem:[#allocation4]] %s0
  $region1: #{tpu_custom_call.1} parent=0
    #allocation5 [shape = 'u8[512]{0}', space=vmem, size = 0x400, scoped, tag = 'output window, operand 0, single buffered']
    #allocation6 [shape = 's32[1]{0}', space=sflag, size = 0x4, scoped, tag = 'scoped memory for tpu_custom_call.1']
    %8 = vsyncpa [#allocation6], 0
    // Predicated region
    $region2: #{tpu_custom_call.1} parent=1 // pred_check
      _
    $region3: #{tpu_custom_call.1} parent=1 // pred_check_branch
      %10 = sbr.rel (0) target = $region5
    $region4: #{tpu_custom_call.1} parent=1 // pred_region
      _
    $region5: #{tpu_custom_call.1} parent=1 // pred_fallthru
      _
    %s11 = sld [smem:[#allocation4]]
    %s12 = scvt.s32.f32 %s11
    %v13 = vstv %s12
    %v14 = vrcp.pop %v13
    %s15 = vtos %v14
    %v16 = vld [vmem:[%s1] sm:$0x1]
    %v17 = vlaneseq
    %v18 = vand.u32 %v17, 127
    %v19 = vstv %s11
    %vm20 = vcmp.lt.s32.totalorder %v18, %v19
    %v21 = vsel %vm20, 1, 0
    %v22 = vcvt.s32.f32 %v21
    %p23 = scmp.eq.s32.totalorder 0, 0
    // Predicated region
    $region6: #{tpu_custom_call.1} parent=1 // pred_check
      %p24 = pneg %p23
    $region7: #{tpu_custom_call.1} parent=1 // pred_check_branch
      %26 = sbr.rel (%p24) target = $region9
    $region8: #{tpu_custom_call.1} parent=1 // pred_region
      %v27 = vld [vmem:[%s1 + $0x1] sm:$0x1]
      %v28 = vsub.f32 %v16, %v27
      %v29 = vmul.f32 %v28, %v28
      %vm30 = vcmask 1040384
      %v31 = vsel %vm30, %v29, 0.0
      %32 = vadd.xlane.f32.xlu0 %v31
      %v33 = vpop.xlane.xlu0 %32
      %v34 = vrot.slane %v33, 4
      %v35 = vadd.f32 %v33, %v34
      %v36 = vrot.slane %v35, 2
      %v37 = vadd.f32 %v35, %v36
      %v38 = vrot.slane %v37, 1
      %v39 = vadd.f32 %v37, %v38
      %s40 = vtos %v39
      %v41 = vstv %s40
      %v42 = vstv %s15
      %v43 = vmul.f32 %v41, %v42
      %v44 = vmul.f32 %v16, %v27
      %v45 = vsel %vm30, %v44, 0.0
      %46 = vadd.xlane.f32.xlu0 %v45
      %v47 = vpop.xlane.xlu0 %46
      %v48 = vrot.slane %v47, 4
      %v49 = vadd.f32 %v47, %v48
      %v50 = vrot.slane %v49, 2
      %v51 = vadd.f32 %v49, %v50
      %v52 = vrot.slane %v51, 1
      %v53 = vadd.f32 %v51, %v52
      %s54 = vtos %v53
      %v55 = vstv %s54
      %v56 = vmul.f32 %v16, %v16
      %v57 = vsel %vm30, %v56, 0.0
      %58 = vadd.xlane.f32.xlu0 %v57
      %v59 = vpop.xlane.xlu0 %58
      %v60 = vrot.slane %v59, 4
      %v61 = vadd.f32 %v59, %v60
      %v62 = vrot.slane %v61, 2
      %v63 = vadd.f32 %v61, %v62
      %v64 = vrot.slane %v63, 1
      %v65 = vadd.f32 %v63, %v64
      %s66 = vtos %v65
      %v67 = vstv %s66
      %v68 = vmul.f32 %v27, %v27
      %v69 = vsel %vm30, %v68, 0.0
      %70 = vadd.xlane.f32.xlu0 %v69
      %v71 = vpop.xlane.xlu0 %70
      %v72 = vrot.slane %v71, 4
      %v73 = vadd.f32 %v71, %v72
      %v74 = vrot.slane %v73, 2
      %v75 = vadd.f32 %v73, %v74
      %v76 = vrot.slane %v75, 1
      %v77 = vadd.f32 %v75, %v76
      %s78 = vtos %v77
      %v79 = vstv %s78
      %v80 = vrsqrt.pop %v67
      %v81 = vmul.f32 %v67, %v80
      %vm82 = vcmp.eq.f32.partialorder %v67, inf
      %v83 = vsel %vm82, %v67, %v81
      %vm84 = vcmp.eq.f32.partialorder %v67, 0.0
      %v85 = vand.u32 %v67, 2147483648
      %v86 = vsel %vm84, %v85, %v83
      %v87 = vrsqrt.pop %v79
      %v88 = vmul.f32 %v79, %v87
      %vm89 = vcmp.eq.f32.partialorder %v79, inf
      %v90 = vsel %vm89, %v79, %v88
      %vm91 = vcmp.eq.f32.partialorder %v79, 0.0
      %v92 = vand.u32 %v79, 2147483648
      %v93 = vsel %vm91, %v92, %v90
      %v94 = vmul.f32 %v86, %v93
      %v95 = vmax.f32 %v94, 1e-08
      %v96 = vrcp.pop %v95
      %v97 = vmul.f32 %v55, %v96
      %v98 = vsub.f32 1.0, %v97
      %v99 = vmul.f32 %v98, 0.25
      %v100 = vadd.f32 %v43, %v99
      %vm101 = vcmask 0
      %102 = vst.msk [vmem:[#allocation2] sm:$0x1] %vm101, %v100
    $region9: #{tpu_custom_call.1} parent=1 // pred_fallthru
      _
    %s103 = smul.u32 0, 128
    %s104 = sshra.s32 %s103, 7
    %s105 = sand.u32 %s103, 127
    %s106 = scalar_lea.vmem %s1, %s104
    %v107 = vld [vmem:[%s106] sm:$0x1]
    %v108 = vlaneseq
    %v109 = vshrl.u32 %v108, 7
    %v110 = vsub.s32 0, %v109
    %v111 = vrot.slane %v107, %v110
    %112 = vxpose.xlu0.b32.start [1/16] %v111, 128
    %113 = vxpose.xlu0.b32.cont [2/16] %v111, 128
    %114 = vxpose.xlu0.b32.cont [3/16] %v111, 128
    %115 = vxpose.xlu0.b32.cont [4/16] %v111, 128
    %116 = vxpose.xlu0.b32.cont [5/16] %v111, 128
    %117 = vxpose.xlu0.b32.cont [6/16] %v111, 128
    %118 = vxpose.xlu0.b32.cont [7/16] %v111, 128
    %119 = vxpose.xlu0.b32.cont [8/16] %v111, 128
    %120 = vxpose.xlu0.b32.cont [9/16] %v111, 128
    %121 = vxpose.xlu0.b32.cont [10/16] %v111, 128
    %122 = vxpose.xlu0.b32.cont [11/16] %v111, 128
    %123 = vxpose.xlu0.b32.cont [12/16] %v111, 128
    %124 = vxpose.xlu0.b32.cont [13/16] %v111, 128
    %125 = vxpose.xlu0.b32.cont [14/16] %v111, 128
    %126 = vxpose.xlu0.b32.cont [15/16] %v111, 128
    %127 = vxpose.xlu0.b32.end [16/16] %v111, 128
    %v128 = vpop.trf.xlu0
    %v129 = vpop.trf.xlu0
    %v130 = vpop.trf.xlu0
    %v131 = vpop.trf.xlu0
    %v132 = vpop.trf.xlu0
    %v133 = vpop.trf.xlu0
    %v134 = vpop.trf.xlu0
    %v135 = vpop.trf.xlu0
    %v136 = vpop.trf.xlu0
    %v137 = vpop.trf.xlu0
    %v138 = vpop.trf.xlu0
    %v139 = vpop.trf.xlu0
    %v140 = vpop.trf.xlu0
    %v141 = vpop.trf.xlu0
    %v142 = vpop.trf.xlu0
    %v143 = vpop.trf.xlu0
    %145 = vset.pattern.permute.xlu0 0
    %146 = vperm.xlu0 %145, %v128
    %v147 = vpop.permute.xlu0 %146
    %150 = vset.pattern.permute.xlu0 0
    %151 = vperm.xlu0 %150, %v129
    %v152 = vpop.permute.xlu0 %151
    %155 = vset.pattern.permute.xlu0 0
    %156 = vperm.xlu0 %155, %v130
    %v157 = vpop.permute.xlu0 %156
    %160 = vset.pattern.permute.xlu0 0
    %161 = vperm.xlu0 %160, %v131
    %v162 = vpop.permute.xlu0 %161
    %165 = vset.pattern.permute.xlu0 0
    %166 = vperm.xlu0 %165, %v132
    %v167 = vpop.permute.xlu0 %166
    %170 = vset.pattern.permute.xlu0 0
    %171 = vperm.xlu0 %170, %v133
    %v172 = vpop.permute.xlu0 %171
    %175 = vset.pattern.permute.xlu0 0
    %176 = vperm.xlu0 %175, %v134
    %v177 = vpop.permute.xlu0 %176
    %180 = vset.pattern.permute.xlu0 0
    %181 = vperm.xlu0 %180, %v135
    %v182 = vpop.permute.xlu0 %181
    %185 = vset.pattern.permute.xlu0 0
    %186 = vperm.xlu0 %185, %v136
    %v187 = vpop.permute.xlu0 %186
    %190 = vset.pattern.permute.xlu0 0
    %191 = vperm.xlu0 %190, %v137
    %v192 = vpop.permute.xlu0 %191
    %195 = vset.pattern.permute.xlu0 0
    %196 = vperm.xlu0 %195, %v138
    %v197 = vpop.permute.xlu0 %196
    %200 = vset.pattern.permute.xlu0 0
    %201 = vperm.xlu0 %200, %v139
    %v202 = vpop.permute.xlu0 %201
    %205 = vset.pattern.permute.xlu0 0
    %206 = vperm.xlu0 %205, %v140
    %v207 = vpop.permute.xlu0 %206
    %210 = vset.pattern.permute.xlu0 0
    %211 = vperm.xlu0 %210, %v141
    %v212 = vpop.permute.xlu0 %211
    %215 = vset.pattern.permute.xlu0 0
    %216 = vperm.xlu0 %215, %v142
    %v217 = vpop.permute.xlu0 %216
    %220 = vset.pattern.permute.xlu0 0
    %221 = vperm.xlu0 %220, %v143
    %v222 = vpop.permute.xlu0 %221
    %v224 = vlaneseq
    %v225 = vshrl.u32 %v224, 7
    %v226 = vsub.s32 0, %v225
    %v227 = vrot.slane %v16, %v226
    %v228 = vsub.f32 %v147, %v227
    %v229 = vsub.f32 %v152, %v227
    %v230 = vsub.f32 %v157, %v227
    %v231 = vsub.f32 %v162, %v227
    %v232 = vsub.f32 %v167, %v227
    %v233 = vsub.f32 %v172, %v227
    %v234 = vsub.f32 %v177, %v227
    %v235 = vsub.f32 %v182, %v227
    %v236 = vsub.f32 %v187, %v227
    %v237 = vsub.f32 %v192, %v227
    %v238 = vsub.f32 %v197, %v227
    %v239 = vsub.f32 %v202, %v227
    %v240 = vsub.f32 %v207, %v227
    %v241 = vsub.f32 %v212, %v227
    %v242 = vsub.f32 %v217, %v227
    %v243 = vsub.f32 %v222, %v227
    %v244 = vmul.f32 %v22, 0.1
    %v245 = vand.u32 2147483647, %v228
    %v246 = vand.u32 2147483647, %v229
    %v247 = vand.u32 2147483647, %v230
    %v248 = vand.u32 2147483647, %v231
    %v249 = vand.u32 2147483647, %v232
    %v250 = vand.u32 2147483647, %v233
    %v251 = vand.u32 2147483647, %v234
    %v252 = vand.u32 2147483647, %v235
    %v253 = vand.u32 2147483647, %v236
    %v254 = vand.u32 2147483647, %v237
    %v255 = vand.u32 2147483647, %v238
    %v256 = vand.u32 2147483647, %v239
    %v257 = vand.u32 2147483647, %v240
    %v258 = vand.u32 2147483647, %v241
    %v259 = vand.u32 2147483647, %v242
    %v260 = vand.u32 2147483647, %v243
    %v261 = vsub.f32 %v244, %v245
    %v262 = vsub.f32 %v244, %v246
    %v263 = vsub.f32 %v244, %v247
    %v264 = vsub.f32 %v244, %v248
    %v265 = vsub.f32 %v244, %v249
    %v266 = vsub.f32 %v244, %v250
    %v267 = vsub.f32 %v244, %v251
    %v268 = vsub.f32 %v244, %v252
    %v269 = vsub.f32 %v244, %v253
    %v270 = vsub.f32 %v244, %v254
    %v271 = vsub.f32 %v244, %v255
    %v272 = vsub.f32 %v244, %v256
    %v273 = vsub.f32 %v244, %v257
    %v274 = vsub.f32 %v244, %v258
    %v275 = vsub.f32 %v244, %v259
    %v276 = vsub.f32 %v244, %v260
    %v277 = vmax.f32 %v261, 0.0
    %v278 = vmax.f32 %v262, 0.0
    %v279 = vmax.f32 %v263, 0.0
    %v280 = vmax.f32 %v264, 0.0
    %v281 = vmax.f32 %v265, 0.0
    %v282 = vmax.f32 %v266, 0.0
    %v283 = vmax.f32 %v267, 0.0
    %v284 = vmax.f32 %v268, 0.0
    %v285 = vmax.f32 %v269, 0.0
    %v286 = vmax.f32 %v270, 0.0
    %v287 = vmax.f32 %v271, 0.0
    %v288 = vmax.f32 %v272, 0.0
    %v289 = vmax.f32 %v273, 0.0
    %v290 = vmax.f32 %v274, 0.0
    %v291 = vmax.f32 %v275, 0.0
    %v292 = vmax.f32 %v276, 0.0
    %293 = vadd.xlane.f32.xlu0 %v277
    %v294 = vpop.xlane.xlu0 %293
    %295 = vadd.xlane.f32.xlu0 %v278
    %v296 = vpop.xlane.xlu0 %295
    %297 = vadd.xlane.f32.xlu0 %v279
    %v298 = vpop.xlane.xlu0 %297
    %299 = vadd.xlane.f32.xlu0 %v280
    %v300 = vpop.xlane.xlu0 %299
    %301 = vadd.xlane.f32.xlu0 %v281
    %v302 = vpop.xlane.xlu0 %301
    %303 = vadd.xlane.f32.xlu0 %v282
    %v304 = vpop.xlane.xlu0 %303
    %305 = vadd.xlane.f32.xlu0 %v283
    %v306 = vpop.xlane.xlu0 %305
    %307 = vadd.xlane.f32.xlu0 %v284
    %v308 = vpop.xlane.xlu0 %307
    %309 = vadd.xlane.f32.xlu0 %v285
    %v310 = vpop.xlane.xlu0 %309
    %311 = vadd.xlane.f32.xlu0 %v286
    %v312 = vpop.xlane.xlu0 %311
    %313 = vadd.xlane.f32.xlu0 %v287
    %v314 = vpop.xlane.xlu0 %313
    %315 = vadd.xlane.f32.xlu0 %v288
    %v316 = vpop.xlane.xlu0 %315
    %317 = vadd.xlane.f32.xlu0 %v289
    %v318 = vpop.xlane.xlu0 %317
    %319 = vadd.xlane.f32.xlu0 %v290
    %v320 = vpop.xlane.xlu0 %319
    %321 = vadd.xlane.f32.xlu0 %v291
    %v322 = vpop.xlane.xlu0 %321
    %323 = vadd.xlane.f32.xlu0 %v292
    %v324 = vpop.xlane.xlu0 %323
    %v325 = vlaneseq
    %v326 = vshrl.u32 %v325, 7
    %v327 = vadd.s32 %v326, 8
    %v328 = vadd.s32 %v326, 16
    %v329 = vadd.s32 %v326, 24
    %v330 = vadd.s32 %v326, 32
    %v331 = vadd.s32 %v326, 40
    %v332 = vadd.s32 %v326, 48
    %v333 = vadd.s32 %v326, 56
    %v334 = vadd.s32 %v326, 64
    %v335 = vadd.s32 %v326, 72
    %v336 = vadd.s32 %v326, 80
    %v337 = vadd.s32 %v326, 88
    %v338 = vadd.s32 %v326, 96
    %v339 = vadd.s32 %v326, 104
    %v340 = vadd.s32 %v326, 112
    %v341 = vadd.s32 %v326, 120
    %v342 = vstv %s103
    %v343 = vadd.s32 %v326, %v342
    %v344 = vadd.s32 %v327, %v342
    %v345 = vadd.s32 %v328, %v342
    %v346 = vadd.s32 %v329, %v342
    %v347 = vadd.s32 %v330, %v342
    %v348 = vadd.s32 %v331, %v342
    %v349 = vadd.s32 %v332, %v342
    %v350 = vadd.s32 %v333, %v342
    %v351 = vadd.s32 %v334, %v342
    %v352 = vadd.s32 %v335, %v342
    %v353 = vadd.s32 %v336, %v342
    %v354 = vadd.s32 %v337, %v342
    %v355 = vadd.s32 %v338, %v342
    %v356 = vadd.s32 %v339, %v342
    %v357 = vadd.s32 %v340, %v342
    %v358 = vadd.s32 %v341, %v342
    %vm359 = vcmp.lt.s32.totalorder %v343, %v19
    %vm360 = vcmp.lt.s32.totalorder %v344, %v19
    %vm361 = vcmp.lt.s32.totalorder %v345, %v19
    %vm362 = vcmp.lt.s32.totalorder %v346, %v19
    %vm363 = vcmp.lt.s32.totalorder %v347, %v19
    %vm364 = vcmp.lt.s32.totalorder %v348, %v19
    %vm365 = vcmp.lt.s32.totalorder %v349, %v19
    %vm366 = vcmp.lt.s32.totalorder %v350, %v19
    %vm367 = vcmp.lt.s32.totalorder %v351, %v19
    %vm368 = vcmp.lt.s32.totalorder %v352, %v19
    %vm369 = vcmp.lt.s32.totalorder %v353, %v19
    %vm370 = vcmp.lt.s32.totalorder %v354, %v19
    %vm371 = vcmp.lt.s32.totalorder %v355, %v19
    %vm372 = vcmp.lt.s32.totalorder %v356, %v19
    %vm373 = vcmp.lt.s32.totalorder %v357, %v19
    %vm374 = vcmp.lt.s32.totalorder %v358, %v19
    %v375 = vsel %vm359, 1, 0
    %v376 = vsel %vm360, 1, 0
    %v377 = vsel %vm361, 1, 0
    %v378 = vsel %vm362, 1, 0
    %v379 = vsel %vm363, 1, 0
    %v380 = vsel %vm364, 1, 0
    %v381 = vsel %vm365, 1, 0
    %v382 = vsel %vm366, 1, 0
    %v383 = vsel %vm367, 1, 0
    %v384 = vsel %vm368, 1, 0
    %v385 = vsel %vm369, 1, 0
    %v386 = vsel %vm370, 1, 0
    %v387 = vsel %vm371, 1, 0
    %v388 = vsel %vm372, 1, 0
    %v389 = vsel %vm373, 1, 0
    %v390 = vsel %vm374, 1, 0
    %v391 = vcvt.s32.f32 %v375
    %v392 = vcvt.s32.f32 %v376
    %v393 = vcvt.s32.f32 %v377
    %v394 = vcvt.s32.f32 %v378
    %v395 = vcvt.s32.f32 %v379
    %v396 = vcvt.s32.f32 %v380
    %v397 = vcvt.s32.f32 %v381
    %v398 = vcvt.s32.f32 %v382
    %v399 = vcvt.s32.f32 %v383
    %v400 = vcvt.s32.f32 %v384
    %v401 = vcvt.s32.f32 %v385
    %v402 = vcvt.s32.f32 %v386
    %v403 = vcvt.s32.f32 %v387
    %v404 = vcvt.s32.f32 %v388
    %v405 = vcvt.s32.f32 %v389
    %v406 = vcvt.s32.f32 %v390
    %v407 = vmul.f32 %v294, %v391
    %v408 = vmul.f32 %v296, %v392
    %v409 = vmul.f32 %v298, %v393
    %v410 = vmul.f32 %v300, %v394
    %v411 = vmul.f32 %v302, %v395
    %v412 = vmul.f32 %v304, %v396
    %v413 = vmul.f32 %v306, %v397
    %v414 = vmul.f32 %v308, %v398
    %v415 = vmul.f32 %v310, %v399
    %v416 = vmul.f32 %v312, %v400
    %v417 = vmul.f32 %v314, %v401
    %v418 = vmul.f32 %v316, %v402
    %v419 = vmul.f32 %v318, %v403
    %v420 = vmul.f32 %v320, %v404
    %v421 = vmul.f32 %v322, %v405
    %v422 = vmul.f32 %v324, %v406
    %vm423 = vcmask 7168
    %v424 = vsel %vm423, %v407, 0.0
    %v425 = vsel %vm423, %v408, 0.0
    %v426 = vadd.f32 %v424, %v425
    %v427 = vsel %vm423, %v409, 0.0
    %v428 = vadd.f32 %v426, %v427
    %v429 = vsel %vm423, %v410, 0.0
    %v430 = vadd.f32 %v428, %v429
    %v431 = vsel %vm423, %v411, 0.0
    %v432 = vadd.f32 %v430, %v431
    %v433 = vsel %vm423, %v412, 0.0
    %v434 = vadd.f32 %v432, %v433
    %v435 = vsel %vm423, %v413, 0.0
    %v436 = vadd.f32 %v434, %v435
    %v437 = vsel %vm423, %v414, 0.0
    %v438 = vadd.f32 %v436, %v437
    %v439 = vsel %vm423, %v415, 0.0
    %v440 = vadd.f32 %v438, %v439
    %v441 = vsel %vm423, %v416, 0.0
    %v442 = vadd.f32 %v440, %v441
    %v443 = vsel %vm423, %v417, 0.0
    %v444 = vadd.f32 %v442, %v443
    %v445 = vsel %vm423, %v418, 0.0
    %v446 = vadd.f32 %v444, %v445
    %v447 = vsel %vm423, %v419, 0.0
    %v448 = vadd.f32 %v446, %v447
    %v449 = vsel %vm423, %v420, 0.0
    %v450 = vadd.f32 %v448, %v449
    %v451 = vsel %vm423, %v421, 0.0
    %v452 = vadd.f32 %v450, %v451
    %v453 = vsel %vm423, %v422, 0.0
    %v454 = vadd.f32 %v452, %v453
    %455 = vadd.xlane.f32.xlu0 %v454
    %v456 = vpop.xlane.xlu0 %455
    %v457 = vrot.slane %v456, 4
    %v458 = vadd.f32 %v456, %v457
    %v459 = vrot.slane %v458, 2
    %v460 = vadd.f32 %v458, %v459
    %v461 = vrot.slane %v460, 1
    %v462 = vadd.f32 %v460, %v461
    %s463 = vtos %v462
    %v464 = vstv %s463
    %v465 = vld [vmem:[#allocation2] sm:$0x1]
    %s466 = smul.f32 %s15, 0.5
    %s467 = smul.f32 %s466, %s15
    %v468 = vstv %s467
    %v469 = vmul.f32 %v468, %v464
    %v470 = vadd.f32 %v465, %v469
    %vm471 = vcmask 0
    %472 = vst.msk [vmem:[#allocation2] sm:$0x1] %vm471, %v470
    // Predicated region
    $region10: #{tpu_custom_call.1} parent=1 // pred_check
      %p473 = pneg %p23
    $region11: #{tpu_custom_call.1} parent=1 // pred_check_branch
      %475 = sbr.rel (%p473) target = $region13
    $region12: #{tpu_custom_call.1} parent=1 // pred_region
      %v476 = vld [vmem:[#allocation2] sm:$0x1]
      %477 = vst.msk [vmem:[#allocation5] sm:$0x1] %vm471, %v476
    $region13: #{tpu_custom_call.1} parent=1 // pred_fallthru
      _
    // Predicated region
    $region14: #{tpu_custom_call.1} parent=1 // pred_check
      _
    $region15: #{tpu_custom_call.1} parent=1 // pred_check_branch
      %479 = sbr.rel (0) target = $region17
    $region16: #{tpu_custom_call.1} parent=1 // pred_region
      %s481 = ssub.s32 16, 16
      %482 = vsyncadd [#allocation6], %s481
      %s484 = sshll.u32 [#allocation5], 4
      %s485 = int_to_ptr.vmem [resolvable:$true] %s484
      %487 = dma.vmem_to_hbm [thread:$0]  %s485, 16, %s2, [#allocation6]
    $region17: #{tpu_custom_call.1} parent=1 // pred_fallthru
      _
    // Predicated region
    $region18: #{tpu_custom_call.1} parent=1 // pred_check
      _
    $region19: #{tpu_custom_call.1} parent=1 // pred_check_branch
      %489 = sbr.rel (0) target = $region21
    $region20: #{tpu_custom_call.1} parent=1 // pred_region
      %490 = dma.done [#allocation6], 16
    $region21: #{tpu_custom_call.1} parent=1 // pred_fallthru
      _
    %491 = vsyncpa [#allocation6], 1

</llo_original>
